<compile_context>
chip_gen: v7x
topology: tpu7x:2x2x1
jax: 0.10.0
libtpu: 0.0.40
codegen_flags: <defaults>
</compile_context>

<pallas_src>
import jax
import jax.numpy as jnp
from jax import lax
from jax.experimental import pallas as pl
from jax.experimental.pallas import tpu as pltpu

LANES = 128
SUBLANES = 8
CHUNK_ROWS = 512          # rows per inner unrolled step: 512*128*4 B = 256 KiB
MAX_BLOCK_ROWS = 4096     # 4096*128*4 B = 2 MiB per input per pipeline buffer
NUM_SPLITS = 2            # leading "parallel" grid axis (both TCs on v7x)


def _round_up(x, m):
    return ((x + m - 1) // m) * m


def _row_align(dtype):
    # Sublane tile height for the dtype (f32: 8, bf16: 16, int8/bool: 32).
    return {4: 8, 2: 16, 1: 32}.get(jnp.dtype(dtype).itemsize, 8)


def dice_loss(mask_preds, mask_targets, eps=1.0):
    """Pallas equivalent of DiceLoss.forward(mask_preds, mask_targets, eps)."""
    n = int(mask_preds.size)
    p_flat = mask_preds.reshape(-1)
    t_flat = mask_targets.reshape(-1)

    row_align = max(SUBLANES, _row_align(mask_preds.dtype),
                    _row_align(mask_targets.dtype))
    rows = pl.cdiv(n, LANES)

    # Static block / chunk geometry.
    if rows <= CHUNK_ROWS:
        # Whole problem is one small block: pad it up to an aligned block
        # (copy of at most CHUNK_ROWS*128 elements — negligible).
        chunk_rows = block_rows = max(row_align, _round_up(rows, row_align))
        rows_padded = block_rows
        n_chunks = 1
    else:
        # Large input: never copy/pad the bulk.  Blocks are a multiple of
        # CHUNK_ROWS and never larger than the array; the last block is a
        # partial edge block whose garbage tail is masked in-kernel.
        chunk_rows = CHUNK_ROWS
        block_rows = min(MAX_BLOCK_ROWS, (rows // chunk_rows) * chunk_rows)
        rows_padded = rows
        n_chunks = block_rows // chunk_rows

    total_pad = rows_padded * LANES - n
    if total_pad > 0:
        # Only hit for small inputs or a <128-element lane tail; pad values are
        # irrelevant because the kernel masks by flat element index < n.
        # TODO(synk): for huge inputs whose size is not a multiple of 128 this
        # still copies the arrays once; handle that <128-element tail in the
        # wrapper instead to make the bulk fully copy-free.
        p_flat = jnp.pad(p_flat, (0, total_pad))
        t_flat = jnp.pad(t_flat, (0, total_pad))
    p_2d = p_flat.reshape(rows_padded, LANES)
    t_2d = t_flat.reshape(rows_padded, LANES)

    n_row_blocks = pl.cdiv(rows_padded, block_rows)
    last_block = n_row_blocks - 1
    num_splits = min(NUM_SPLITS, n_row_blocks)
    blocks_per_split = pl.cdiv(n_row_blocks, num_splits)

    def kernel(preds_ref, targets_ref, pt_ref, den_ref):
        s = pl.program_id(0)          # "parallel" split (core) axis
        j = pl.program_id(1)          # "arbitrary" reduction axis

        @pl.when(j == 0)
        def _():
            pt_ref[...] = jnp.zeros_like(pt_ref)
            den_ref[...] = jnp.zeros_like(den_ref)

        # Intended (unclamped) block index: the validity mask is derived from
        # it, so blocks clamped by the index_map contribute exactly zero.
        base_row = (s * blocks_per_split + j) * block_rows

        elem_iota = (
            lax.broadcasted_iota(jnp.int32, (chunk_rows, LANES), 0) * LANES
            + lax.broadcasted_iota(jnp.int32, (chunk_rows, LANES), 1)
        )

        def process_chunk(r0):
            x = preds_ref[pl.ds(r0, chunk_rows), :].astype(jnp.float32)
            t = targets_ref[pl.ds(r0, chunk_rows), :].astype(jnp.float32)
            # One mask handles lane/row padding, partial edge blocks and
            # clamped out-of-range blocks; the where-select also stops NaNs in
            # edge-block garbage from propagating.
            mask = (base_row + r0) * LANES + elem_iota < n
            # sigmoid(x) == 0.5*tanh(0.5*x) + 0.5: one EUP transcendental
            # instead of the exp + reciprocal + select chain.
            p = jnp.where(mask, 0.5 * jnp.tanh(0.5 * x) + 0.5, 0.0)
            t = jnp.where(mask, t, 0.0)
            # Fold the chunk to (8,128) partials before touching the
            # accumulators, keeping accumulator load/store traffic tiny.
            pt_ref[...] += jnp.sum((p * t).reshape(-1, SUBLANES, LANES), axis=0)
            den_ref[...] += jnp.sum((p + t).reshape(-1, SUBLANES, LANES), axis=0)

        if n_chunks == 1:
            process_chunk(0)
        else:
            def body(c, carry):
                process_chunk(pl.multiple_of(c * chunk_rows, chunk_rows))
                return carry
            lax.fori_loop(0, n_chunks, body, 0, unroll=True)

    def in_index_map(s, j):
        # Clamp intended-but-out-of-range blocks onto the last valid block;
        # the in-kernel mask (based on the intended index) zeroes their data.
        return (jnp.minimum(s * blocks_per_split + j, last_block), 0)

    pt_parts, den_parts = pl.pallas_call(
        kernel,
        out_shape=(
            jax.ShapeDtypeStruct((num_splits, SUBLANES, LANES), jnp.float32),
            jax.ShapeDtypeStruct((num_splits, SUBLANES, LANES), jnp.float32),
        ),
        grid_spec=pltpu.PrefetchScalarGridSpec(
            num_scalar_prefetch=0,
            grid=(num_splits, blocks_per_split),
            in_specs=[
                pl.BlockSpec((block_rows, LANES), in_index_map),
                pl.BlockSpec((block_rows, LANES), in_index_map),
            ],
            out_specs=[
                pl.BlockSpec((None, SUBLANES, LANES), lambda s, j: (s, 0, 0)),
                pl.BlockSpec((None, SUBLANES, LANES), lambda s, j: (s, 0, 0)),
            ],
        ),
        compiler_params=pltpu.CompilerParams(
            dimension_semantics=("parallel", "arbitrary"),
            vmem_limit_bytes=32 * 1024 * 1024,
        ),
    )(p_2d, t_2d)

    # Tiny epilogue: combine per-split (8,128) partials and finish the dice
    # arithmetic (this is what lets the splits run independently on v7x).
    eps = jnp.float32(eps)
    inter = jnp.sum(pt_parts)
    denom = jnp.sum(den_parts)
    dice = (inter * 2.0 + eps) / (denom + eps)
    return 1.0 - dice


def dice_loss_ref(mask_preds, mask_targets, eps=1.0):
    p = jax.nn.sigmoid(mask_preds.astype(jnp.float32)).reshape(-1)
    t = mask_targets.astype(jnp.float32).reshape(-1)
    inter = jnp.sum(p * t)
    dice = (inter * 2.0 + eps) / (jnp.sum(p) + jnp.sum(t) + eps)
    return 1.0 - dice


if __name__ == "__main__":
    key = jax.random.PRNGKey(0)
    k1, k2 = jax.random.split(key)
    # Logits + binary masks, NCHW like the torch module.
    mask_preds = jax.random.normal(k1, (2, 4, 16, 16), dtype=jnp.float32)
    mask_targets = (jax.random.uniform(k2, (2, 4, 16, 16)) > 0.5).astype(jnp.float32)

    loss = jax.block_until_ready(dice_loss(mask_preds, mask_targets, eps=1.0))
    ref = dice_loss_ref(mask_preds, mask_targets, eps=1.0)
    assert jnp.allclose(loss, ref, atol=1e-5, rtol=1e-4), (loss, ref)

    # Extra shapes exercising the tail-mask, multi-block, partial-edge-block
    # and core-split (clamped block) paths.
    for idx, shape in enumerate([(3, 5, 7, 11), (90, 100, 128)]):
        ka, kb = jax.random.split(jax.random.fold_in(key, idx + 1))
        p = jax.random.normal(ka, shape, dtype=jnp.float32)
        t = (jax.random.uniform(kb, shape) > 0.5).astype(jnp.float32)
        got = jax.block_until_ready(dice_loss(p, t, eps=1.0))
        want = dice_loss_ref(p, t, eps=1.0)
        assert jnp.allclose(got, want, atol=1e-5, rtol=1e-4), (shape, got, want)

    print("KERNEL_OK")
</pallas_src>

<mosaic_0001>
module attributes {stable_mosaic.version = 11 : i64} {
  func.func @kernel(%arg0: i32, %arg1: i32, %arg2: memref<16x128xf32, #tpu.memory_space<vmem>>, %arg3: memref<16x128xf32, #tpu.memory_space<vmem>>, %arg4: memref<1x8x128xf32, #tpu.memory_space<vmem>>, %arg5: memref<1x8x128xf32, #tpu.memory_space<vmem>>) attributes {dimension_semantics = [#tpu.dimension_semantics<parallel>, #tpu.dimension_semantics<arbitrary>], iteration_bounds = array<i64: 1, 1>, scalar_prefetch = 0 : i64, scratch_operands = 0 : i64, tpu.core_type = #tpu.core_type<tc>, window_params = [{transform_indices = @transform_0, window_bounds = array<i64: 16, 128>}, {transform_indices = @transform_1, window_bounds = array<i64: 16, 128>}, {transform_indices = @transform_2, window_bounds = array<i64: 1, 8, 128>}, {transform_indices = @transform_3, window_bounds = array<i64: 1, 8, 128>}]} {
    %c0_i32 = arith.constant 0 : i32
    %0 = arith.cmpi eq, %arg1, %c0_i32 : i32
    %1 = arith.extui %0 : i1 to i32
    %c0_i32_0 = arith.constant 0 : i32
    %2 = arith.cmpi ne, %1, %c0_i32_0 : i32
    scf.if %2 {
      %cst_24 = arith.constant 0.000000e+00 : f32
      %48 = vector.broadcast %cst_24 : f32 to vector<8x128xf32>
      %c0_25 = arith.constant 0 : index
      %c0_26 = arith.constant 0 : index
      %c0_27 = arith.constant 0 : index
      %49 = vector.load %arg4[%c0_25, %c0_26, %c0_27] : memref<1x8x128xf32, #tpu.memory_space<vmem>>, vector<1x8x128xf32>
      %50 = vector.shape_cast %49 : vector<1x8x128xf32> to vector<8x128xf32>
      %51 = vector.shape_cast %48 : vector<8x128xf32> to vector<1x8x128xf32>
      tpu.vector_store %arg4[%c0_25, %c0_26, %c0_27], %51 {strides = array<i32>} : memref<1x8x128xf32, #tpu.memory_space<vmem>>, vector<1x8x128xf32>,
      %cst_28 = arith.constant 0.000000e+00 : f32
      %52 = vector.broadcast %cst_28 : f32 to vector<8x128xf32>
      %c0_29 = arith.constant 0 : index
      %c0_30 = arith.constant 0 : index
      %c0_31 = arith.constant 0 : index
      %53 = vector.load %arg5[%c0_29, %c0_30, %c0_31] : memref<1x8x128xf32, #tpu.memory_space<vmem>>, vector<1x8x128xf32>
      %54 = vector.shape_cast %53 : vector<1x8x128xf32> to vector<8x128xf32>
      %55 = vector.shape_cast %52 : vector<8x128xf32> to vector<1x8x128xf32>
      tpu.vector_store %arg5[%c0_29, %c0_30, %c0_31], %55 {strides = array<i32>} : memref<1x8x128xf32, #tpu.memory_space<vmem>>, vector<1x8x128xf32>,
    } else {
    }
    %c1_i32 = arith.constant 1 : i32
    %3 = arith.muli %arg0, %c1_i32 : i32
    %4 = arith.addi %3, %arg1 : i32
    %c16_i32 = arith.constant 16 : i32
    %5 = arith.muli %4, %c16_i32 : i32
    %6 = tpu.iota {dimensions = array<i32: 0>} : vector<16x128xi32>
    %c128_i32 = arith.constant 128 : i32
    %7 = vector.broadcast %c128_i32 : i32 to vector<16x128xi32>
    %8 = arith.muli %6, %7 : vector<16x128xi32>
    %9 = tpu.iota {dimensions = array<i32: 1>} : vector<16x128xi32>
    %10 = arith.addi %8, %9 : vector<16x128xi32>
    %c0 = arith.constant 0 : index
    %c0_1 = arith.constant 0 : index
    %11 = vector.load %arg2[%c0, %c0_1] : memref<16x128xf32, #tpu.memory_space<vmem>>, vector<16x128xf32>
    %c0_2 = arith.constant 0 : index
    %c0_3 = arith.constant 0 : index
    %12 = vector.load %arg3[%c0_2, %c0_3] : memref<16x128xf32, #tpu.memory_space<vmem>>, vector<16x128xf32>
    %c0_i32_4 = arith.constant 0 : i32
    %13 = arith.addi %5, %c0_i32_4 : i32
    %c128_i32_5 = arith.constant 128 : i32
    %14 = arith.muli %13, %c128_i32_5 : i32
    %15 = vector.broadcast %14 : i32 to vector<16x128xi32>
    %16 = arith.addi %15, %10 : vector<16x128xi32>
    %c2048_i32 = arith.constant 2048 : i32
    %17 = vector.broadcast %c2048_i32 : i32 to vector<16x128xi32>
    %18 = arith.cmpi slt, %16, %17 : vector<16x128xi32>
    %cst = arith.constant 5.000000e-01 : f32
    %19 = vector.broadcast %cst : f32 to vector<16x128xf32>
    %20 = arith.mulf %19, %11 : vector<16x128xf32>
    %21 = math.tanh %20 : vector<16x128xf32>
    %cst_6 = arith.constant 5.000000e-01 : f32
    %22 = vector.broadcast %cst_6 : f32 to vector<16x128xf32>
    %23 = arith.mulf %22, %21 : vector<16x128xf32>
    %cst_7 = arith.constant 5.000000e-01 : f32
    %24 = vector.broadcast %cst_7 : f32 to vector<16x128xf32>
    %25 = arith.addf %23, %24 : vector<16x128xf32>
    %cst_8 = arith.constant 0.000000e+00 : f32
    %26 = vector.broadcast %cst_8 : f32 to vector<16x128xf32>
    %27 = arith.select %18, %25, %26 : vector<16x128xi1>, vector<16x128xf32>
    %cst_9 = arith.constant 0.000000e+00 : f32
    %28 = vector.broadcast %cst_9 : f32 to vector<16x128xf32>
    %29 = arith.select %18, %12, %28 : vector<16x128xi1>, vector<16x128xf32>
    %c0_10 = arith.constant 0 : index
    %c0_11 = arith.constant 0 : index
    %c0_12 = arith.constant 0 : index
    %30 = vector.load %arg4[%c0_10, %c0_11, %c0_12] : memref<1x8x128xf32, #tpu.memory_space<vmem>>, vector<1x8x128xf32>
    %31 = vector.shape_cast %30 : vector<1x8x128xf32> to vector<8x128xf32>
    %32 = arith.mulf %27, %29 : vector<16x128xf32>
    %33 = vector.shape_cast %32 : vector<16x128xf32> to vector<2x8x128xf32>
    %cst_13 = arith.constant dense<0.000000e+00> : vector<8x128xf32>
    %34 = vector.multi_reduction <add>, %33, %cst_13 [0] : vector<2x8x128xf32> to vector<8x128xf32>
    %35 = arith.addf %31, %34 : vector<8x128xf32>
    %c0_14 = arith.constant 0 : index
    %c0_15 = arith.constant 0 : index
    %c0_16 = arith.constant 0 : index
    %36 = vector.load %arg4[%c0_14, %c0_15, %c0_16] : memref<1x8x128xf32, #tpu.memory_space<vmem>>, vector<1x8x128xf32>
    %37 = vector.shape_cast %36 : vector<1x8x128xf32> to vector<8x128xf32>
    %38 = vector.shape_cast %35 : vector<8x128xf32> to vector<1x8x128xf32>
    tpu.vector_store %arg4[%c0_14, %c0_15, %c0_16], %38 {strides = array<i32>} : memref<1x8x128xf32, #tpu.memory_space<vmem>>, vector<1x8x128xf32>,
    %c0_17 = arith.constant 0 : index
    %c0_18 = arith.constant 0 : index
    %c0_19 = arith.constant 0 : index
    %39 = vector.load %arg5[%c0_17, %c0_18, %c0_19] : memref<1x8x128xf32, #tpu.memory_space<vmem>>, vector<1x8x128xf32>
    %40 = vector.shape_cast %39 : vector<1x8x128xf32> to vector<8x128xf32>
    %41 = arith.addf %27, %29 : vector<16x128xf32>
    %42 = vector.shape_cast %41 : vector<16x128xf32> to vector<2x8x128xf32>
    %cst_20 = arith.constant dense<0.000000e+00> : vector<8x128xf32>
    %43 = vector.multi_reduction <add>, %42, %cst_20 [0] : vector<2x8x128xf32> to vector<8x128xf32>
    %44 = arith.addf %40, %43 : vector<8x128xf32>
    %c0_21 = arith.constant 0 : index
    %c0_22 = arith.constant 0 : index
    %c0_23 = arith.constant 0 : index
    %45 = vector.load %arg5[%c0_21, %c0_22, %c0_23] : memref<1x8x128xf32, #tpu.memory_space<vmem>>, vector<1x8x128xf32>
    %46 = vector.shape_cast %45 : vector<1x8x128xf32> to vector<8x128xf32>
    %47 = vector.shape_cast %44 : vector<8x128xf32> to vector<1x8x128xf32>
    tpu.vector_store %arg5[%c0_21, %c0_22, %c0_23], %47 {strides = array<i32>} : memref<1x8x128xf32, #tpu.memory_space<vmem>>, vector<1x8x128xf32>,
    return
  }
  func.func @transform_0(%arg0: i32, %arg1: i32) -> (i32, i32) {
    %c1_i32 = arith.constant 1 : i32
    %0 = arith.muli %arg0, %c1_i32 : i32
    %1 = arith.addi %0, %arg1 : i32
    %c0_i32 = arith.constant 0 : i32
    %2 = arith.minsi %1, %c0_i32 : i32
    %c0_i32_0 = arith.constant 0 : i32
    %c0_i32_1 = arith.constant 0 : i32
    return %2, %c0_i32_0 : i32, i32
  }
  func.func @transform_1(%arg0: i32, %arg1: i32) -> (i32, i32) {
    %c1_i32 = arith.constant 1 : i32
    %0 = arith.muli %arg0, %c1_i32 : i32
    %1 = arith.addi %0, %arg1 : i32
    %c0_i32 = arith.constant 0 : i32
    %2 = arith.minsi %1, %c0_i32 : i32
    %c0_i32_0 = arith.constant 0 : i32
    %c0_i32_1 = arith.constant 0 : i32
    return %2, %c0_i32_0 : i32, i32
  }
  func.func @transform_2(%arg0: i32, %arg1: i32) -> (i32, i32, i32) {
    %c0_i32 = arith.constant 0 : i32
    %c0_i32_0 = arith.constant 0 : i32
    %c0_i32_1 = arith.constant 0 : i32
    return %arg0, %c0_i32, %c0_i32_0 : i32, i32, i32
  }
  func.func @transform_3(%arg0: i32, %arg1: i32) -> (i32, i32, i32) {
    %c0_i32 = arith.constant 0 : i32
    %c0_i32_0 = arith.constant 0 : i32
    %c0_i32_1 = arith.constant 0 : i32
    return %arg0, %c0_i32, %c0_i32_0 : i32, i32, i32
  }
}

</mosaic_0001>

<llo_original>
// kernel: tpu_custom_call.1
$region0: #{tpu_custom_call.1}
  #allocation0 [shape = 'u32[]', space=smem, size = 0x4, offset = 0x4, fixed_abs, tag = 'smem constant byte address 0x4 - core index']
  #allocation1 [shape = 'u32[144,128]{1,0:T(1,128)}', space=vmem, size = 0x12000, scoped, tag = 'internal scratch']
  %s0 = inlined_call_operand.hbm [shape: f32[16,128], index: 0, kind: input, shape index: {}]
  %s1 = inlined_call_operand.hbm [shape: f32[16,128], index: 1, kind: input, shape index: {}]
  %s2 = inlined_call_operand.hbm [shape: f32[1,8,128], index: 2, kind: output, shape index: {0}]
  %s3 = inlined_call_operand.hbm [shape: f32[1,8,128], index: 3, kind: output, shape index: {1}]
  %4 = xla_tuple %s2, %s3
  %s5 = sld [smem:[#allocation0]]
  $region38: #{tpu_custom_call.1} parent=0
    _
  %s7 = ssub.s32 1, %s5
  %s8 = scalar_select 0, %s7, %s5
  $region1: #{tpu_custom_call.1} parent=0
    #allocation2 [shape = 'u8[8192]{0}', space=vmem, size = 0x2000, scoped, tag = 'input window, operand 0, single buffered']
    #allocation3 [shape = 's32[1]{0}', space=sflag, size = 0x4, scoped, tag = 'scoped memory for tpu_custom_call.1']
    #allocation4 [shape = 's32[1]{0}', space=sflag, size = 0x4, scoped, tag = 'scoped memory for tpu_custom_call.1']
    #allocation5 [shape = 'u8[8192]{0}', space=vmem, size = 0x2000, scoped, tag = 'input window, operand 1, single buffered']
    #allocation6 [shape = 's32[1]{0}', space=sflag, size = 0x4, scoped, tag = 'scoped memory for tpu_custom_call.1']
    #allocation7 [shape = 'u8[4096]{0}', space=vmem, size = 0x1000, scoped, tag = 'output window, operand 0, single buffered']
    #allocation8 [shape = 'u8[4096]{0}', space=vmem, size = 0x1000, scoped, tag = 'output window, operand 1, single buffered']
    #allocation9 [shape = 's32[1]{0}', space=sflag, size = 0x4, scoped, tag = 'scoped memory for tpu_custom_call.1']
    %9 = vsyncpa [#allocation3], 0
    %10 = vsyncpa [#allocation6], 0
    %11 = vsyncpa [#allocation4], 0
    %12 = vsyncpa [#allocation9], 0
    // Predicated region
    $region2: #{tpu_custom_call.1} parent=1 // pred_check
      _
    $region3: #{tpu_custom_call.1} parent=1 // pred_check_branch
      %14 = sbr.rel (0) target = $region5
    $region4: #{tpu_custom_call.1} parent=1 // pred_region
      %s15 = sadd.s32 0, 0
      %p16 = scmp.lt.s32.totalorder %s15, 0
      %s17 = scalar_select %p16, %s15, 0
      %s18 = smul.u32 2, %s17
      %s20 = ssub.s32 256, 256
      %21 = vsyncadd [#allocation3], %s20
      %s22 = smul.addr %s18, 128
      %s23 = scalar_lea.hbm %s0, %s22
      %s24 = sshll.u32 [#allocation2], 4
      %s25 = int_to_ptr.vmem [resolvable:$true] %s24
      %30 = dma.hbm_to_vmem [thread:$0]  %s23, 256, %s25, [#allocation3], 128, 128, 8
    $region5: #{tpu_custom_call.1} parent=1 // pred_fallthru
      _
    // Predicated region
    $region6: #{tpu_custom_call.1} parent=1 // pred_check
      _
    $region7: #{tpu_custom_call.1} parent=1 // pred_check_branch
      %32 = sbr.rel (0) target = $region9
    $region8: #{tpu_custom_call.1} parent=1 // pred_region
      %s33 = sadd.s32 0, 0
      %p34 = scmp.lt.s32.totalorder %s33, 0
      %s35 = scalar_select %p34, %s33, 0
      %s36 = smul.u32 2, %s35
      %s38 = ssub.s32 256, 256
      %39 = vsyncadd [#allocation6], %s38
      %s40 = smul.addr %s36, 128
      %s41 = scalar_lea.hbm %s1, %s40
      %s42 = sshll.u32 [#allocation5], 4
      %s43 = int_to_ptr.vmem [resolvable:$true] %s42
      %48 = dma.hbm_to_vmem [thread:$0]  %s41, 256, %s43, [#allocation6], 128, 128, 8
    $region9: #{tpu_custom_call.1} parent=1 // pred_fallthru
      _
    // Predicated region
    $region10: #{tpu_custom_call.1} parent=1 // pred_check
      _
    $region11: #{tpu_custom_call.1} parent=1 // pred_check_branch
      %50 = sbr.rel (0) target = $region13
    $region12: #{tpu_custom_call.1} parent=1 // pred_region
      %51 = dma.done [#allocation3], 256
    $region13: #{tpu_custom_call.1} parent=1 // pred_fallthru
      _
    // Predicated region
    $region14: #{tpu_custom_call.1} parent=1 // pred_check
      _
    $region15: #{tpu_custom_call.1} parent=1 // pred_check_branch
      %53 = sbr.rel (0) target = $region17
    $region16: #{tpu_custom_call.1} parent=1 // pred_region
      %54 = dma.done [#allocation6], 256
    $region17: #{tpu_custom_call.1} parent=1 // pred_fallthru
      _
    %s55 = sadd.s32 0, 0
    %p56 = scmp.lt.s32.totalorder %s55, 0
    %s57 = scalar_select %p56, %s55, 0
    %s58 = smul.u32 2, %s57
    %s59 = sadd.s32 0, 0
    %p60 = scmp.lt.s32.totalorder %s59, 0
    %s61 = scalar_select %p60, %s59, 0
    %s62 = smul.u32 2, %s61
    %p63 = scmp.eq.s32.totalorder 0, 0
    // Predicated region
    $region18: #{tpu_custom_call.1} parent=1 // pred_check
      %p64 = pneg %p63
    $region19: #{tpu_custom_call.1} parent=1 // pred_check_branch
      %66 = sbr.rel (%p64) target = $region21
    $region20: #{tpu_custom_call.1} parent=1 // pred_region
      %67 = vst [vmem:[#allocation7] sm:$0xff] 0.0
      %68 = vst [vmem:[#allocation8] sm:$0xff] 0.0
    $region21: #{tpu_custom_call.1} parent=1 // pred_fallthru
      _
    %s69 = sadd.s32 0, 0
    %v70 = vlaneseq
    %v71 = vshrl.u32 %v70, 7
    %v72 = vadd.s32 %v71, 8
    %v73 = vmul.u32 %v71, 128
    %v74 = vmul.u32 %v72, 128
    %v75 = vlaneseq
    %v76 = vand.u32 %v75, 127
    %v77 = vadd.s32 %v73, %v76
    %v78 = vadd.s32 %v74, %v76
    %v79 = vld [vmem:[#allocation2] sm:$0xff]
    %v80 = vld [vmem:[#allocation2 + $0x8] sm:$0xff]
    %v81 = vld [vmem:[#allocation5] sm:$0xff]
    %v82 = vld [vmem:[#allocation5 + $0x8] sm:$0xff]
    %s83 = smul.u32 %s69, 2048
    %v84 = vstv %s83
    %v85 = vadd.s32 %v84, %v77
    %v86 = vadd.s32 %v84, %v78
    %vm87 = vcmp.lt.s32.totalorder %v85, 2048
    %vm88 = vcmp.lt.s32.totalorder %v86, 2048
    %v89 = vmul.f32 %v79, 0.5
    %v90 = vmul.f32 %v80, 0.5
    %v91 = vtanh.pop %v89
    %v92 = vtanh.pop %v90
    %v93 = vmul.f32 %v91, 0.5
    %v94 = vmul.f32 %v92, 0.5
    %v95 = vadd.f32 %v93, 0.5
    %v96 = vadd.f32 %v94, 0.5
    %v97 = vsel %vm87, %v95, 0.0
    %v98 = vsel %vm88, %v96, 0.0
    %v99 = vsel %vm87, %v81, 0.0
    %v100 = vsel %vm88, %v82, 0.0
    %v101 = vld [vmem:[#allocation7] sm:$0xff]
    %v102 = vmul.f32 %v97, %v99
    %v103 = vmul.f32 %v98, %v100
    %v104 = vadd.f32 %v102, %v103
    %v105 = vadd.f32 %v101, %v104
    %106 = vst [vmem:[#allocation7] sm:$0xff] %v105
    %v107 = vld [vmem:[#allocation8] sm:$0xff]
    %v108 = vadd.f32 %v97, %v99
    %v109 = vadd.f32 %v98, %v100
    %v110 = vadd.f32 %v108, %v109
    %v111 = vadd.f32 %v107, %v110
    %112 = vst [vmem:[#allocation8] sm:$0xff] %v111
    // Predicated region
    $region22: #{tpu_custom_call.1} parent=1 // pred_check
      _
    $region23: #{tpu_custom_call.1} parent=1 // pred_check_branch
      %114 = sbr.rel (0) target = $region25
    $region24: #{tpu_custom_call.1} parent=1 // pred_region
      %s116 = ssub.s32 128, 128
      %117 = vsyncadd [#allocation4], %s116
      %s119 = sshll.u32 [#allocation7], 4
      %s120 = int_to_ptr.vmem [resolvable:$true] %s119
      %122 = dma.vmem_to_hbm [thread:$0]  %s120, 128, %s2, [#allocation4]
    $region25: #{tpu_custom_call.1} parent=1 // pred_fallthru
      _
    // Predicated region
    $region26: #{tpu_custom_call.1} parent=1 // pred_check
      _
    $region27: #{tpu_custom_call.1} parent=1 // pred_check_branch
      %124 = sbr.rel (0) target = $region29
    $region28: #{tpu_custom_call.1} parent=1 // pred_region
      %s126 = ssub.s32 128, 128
      %127 = vsyncadd [#allocation9], %s126
      %s129 = sshll.u32 [#allocation8], 4
      %s130 = int_to_ptr.vmem [resolvable:$true] %s129
      %132 = dma.vmem_to_hbm [thread:$0]  %s130, 128, %s3, [#allocation9]
    $region29: #{tpu_custom_call.1} parent=1 // pred_fallthru
      _
    // Predicated region
    $region30: #{tpu_custom_call.1} parent=1 // pred_check
      _
    $region31: #{tpu_custom_call.1} parent=1 // pred_check_branch
      %134 = sbr.rel (0) target = $region33
    $region32: #{tpu_custom_call.1} parent=1 // pred_region
      %135 = dma.done [#allocation4], 128
    $region33: #{tpu_custom_call.1} parent=1 // pred_fallthru
      _
    // Predicated region
    $region34: #{tpu_custom_call.1} parent=1 // pred_check
      _
    $region35: #{tpu_custom_call.1} parent=1 // pred_check_branch
      %137 = sbr.rel (0) target = $region37
    $region36: #{tpu_custom_call.1} parent=1 // pred_region
      %138 = dma.done [#allocation9], 128
    $region37: #{tpu_custom_call.1} parent=1 // pred_fallthru
      _
    %139 = vsyncpa [#allocation3], 1
    %140 = vsyncpa [#allocation6], 1
    %141 = vsyncpa [#allocation4], 1
    %142 = vsyncpa [#allocation9], 1

</llo_original>
